<compile_context>
chip_gen: v6e
topology: v6e:2x2x1
jax: 0.10.0
libtpu: 0.0.40
codegen_flags: <defaults>
</compile_context>

<pallas_src>
import functools
import math

import jax
import jax.numpy as jnp
from jax.experimental import pallas as pl
from jax.experimental.pallas import tpu as pltpu


def _choose_tile_rows(H, W, Cin, Cmid, Cout, itemsize, budget_bytes=20 << 20):
    """Largest row block TR (dividing H; TR*W % 128 == 0 unless TR == H) whose
    double-buffered blocks + f32 temporaries fit the VMEM budget."""
    candidates = [d for d in range(1, H + 1)
                  if H % d == 0 and (d == H or (d * W) % 128 == 0)]
    fitting = []
    for tr in candidates:
        tw, ext = tr * W, (tr + 2) * W
        blocks = 2 * itemsize * (Cin * tw + 2 * Cin * W + Cout * tw)   # dbl-buffered I/O
        interm = 4 * (Cin * ext + 6 * Cmid * (ext + 2) + 3 * Cmid * tw)  # f32 temps (rough)
        if blocks + interm <= budget_bytes:
            fitting.append(tr)
    return max(fitting) if fitting else min(candidates)


def ghost_kernel(x_ref, top_ref, bot_ref, w1_ref, s1_ref, b1_ref,
                 wdw_ref, s2_ref, b2_ref, out_ref, *, W, tile_rows, use_mxu):
    # x_ref:   (Cin,  TR*W)  row-block of the image, channels on sublanes
    # top/bot: (Cin,  W)     halo rows (row above / below this block)
    # w1_ref:  (Cmid, Cin)   1x1 conv weight
    # s1/b1:   (Cmid, 1)     folded BN1 scale / shift
    # wdw_ref: (Cmid, 9)     3x3 depthwise taps, tap index = 3*dy + dx
    # s2/b2:   (Cmid, 1)     folded BN2 scale / shift
    # out_ref: (Cout, TR*W)
    f32 = jnp.float32
    TRW = tile_rows * W
    E = TRW + 2 * W                       # extended (halo-augmented) flat length
    Cin = x_ref.shape[0]
    Cmid = w1_ref.shape[0]
    Cout = out_ref.shape[0]

    t = pl.program_id(1)
    nt = pl.num_programs(1)

    # ---- assemble [top halo row | tile rows | bottom halo row] ----
    x_ext = jnp.concatenate([top_ref[...], x_ref[...], bot_ref[...]],
                            axis=1).astype(f32)               # (Cin, E)

    # ---- primary 1x1 conv -> ReLU -> folded BN (halo rows included) ----
    if use_mxu:
        # TODO(synk): cast both operands to bf16 here on v6e/v7x.
        y = jnp.dot(w1_ref[...].astype(f32), x_ext, preferred_element_type=f32)
    else:
        # tiny-channel path: Cin broadcast-FMAs on the VPU, multi-accumulator.
        w1 = w1_ref[...].astype(f32)
        n_acc = min(4, Cin)
        parts = [w1[:, c:c + 1] * x_ext[c:c + 1, :] for c in range(n_acc)]
        for c in range(n_acc, Cin):
            parts[c % n_acc] = parts[c % n_acc] + w1[:, c:c + 1] * x_ext[c:c + 1, :]
        y = parts[0]
        for p in parts[1:]:
            y = y + p
    y = jnp.maximum(y, 0.0)                                    # Conv -> ReLU -> BN
    x1e = y * s1_ref[...] + b1_ref[...]                        # (Cmid, E)

    # ---- zero the halo rows that correspond to image (zero) padding ----
    lane = jax.lax.broadcasted_iota(jnp.int32, (1, E), 1)
    top_scale = jnp.where(t > 0, 1.0, 0.0)
    bot_scale = jnp.where(t < nt - 1, 1.0, 0.0)
    scale = jnp.where(lane < W, top_scale,
                      jnp.where(lane >= E - W, bot_scale, 1.0))
    x1e = x1e * scale

    # ---- depthwise 3x3 (padding=1) as 9 static lane-offset slices ----
    # Pad by one zero lane per side; precompute the two column-masked variants
    # once (hoisted out of the tap loop).  Every tap is then a pure slice+FMA.
    zcol = jnp.zeros((Cmid, 1), f32)
    x1p = jnp.concatenate([zcol, x1e, zcol], axis=1)           # (Cmid, E + 2)
    colp = (jax.lax.broadcasted_iota(jnp.int32, (1, E + 2), 1) + (W - 1)) % W
    x1p_l = jnp.where(colp == W - 1, 0.0, x1p)   # taps that read the LEFT neighbour
    x1p_r = jnp.where(colp == 0, 0.0, x1p)       # taps that read the RIGHT neighbour
    srcs = (x1p_l, x1p, x1p_r)

    wk = wdw_ref[...].astype(f32)                              # (Cmid, 9)
    accs = [None, None, None]                                  # break the add chain
    for dy in range(3):
        for dx in range(3):
            start = dy * W + dx           # == W + ((dy-1)*W + (dx-1)) + 1
            val = srcs[dx][:, start:start + TRW]
            term = wk[:, 3 * dy + dx:3 * dy + dx + 1] * val
            accs[dx] = term if accs[dx] is None else accs[dx] + term
    acc = (accs[0] + accs[1]) + accs[2]
    acc = jnp.maximum(acc, 0.0)                                # ReLU
    x2 = acc * s2_ref[...] + b2_ref[...]                       # folded BatchNorm

    # ---- write channel slices: one aligned store when possible ----
    x1c = x1e[:, W:W + TRW]                                    # central tile of x1
    if Cout <= Cmid:
        out_ref[...] = x1c[:Cout, :].astype(out_ref.dtype)
    elif Cmid % 8 == 0:
        out_ref[:Cmid, :] = x1c.astype(out_ref.dtype)
        out_ref[Cmid:, :] = x2[:Cout - Cmid, :].astype(out_ref.dtype)
    else:
        full = jnp.concatenate([x1c, x2[:Cout - Cmid, :]], axis=0)
        out_ref[...] = full.astype(out_ref.dtype)


def ghost_module_forward(x_nchw, params, out_channels):
    N, Cin, H, W = x_nchw.shape
    w1 = params["w1"]                    # (Cmid, Cin)
    s1, b1 = params["s1"], params["b1"]  # (Cmid, 1)
    wdw = params["wdw"]                  # (Cmid, 9)
    s2, b2 = params["s2"], params["b2"]  # (Cmid, 1)
    Cmid = w1.shape[0]
    HW = H * W
    itemsize = jnp.dtype(x_nchw.dtype).itemsize

    TR = _choose_tile_rows(H, W, Cin, Cmid, out_channels, itemsize)
    num_tiles = H // TR
    TRW = TR * W

    # Free layout change: NCHW -> (N, C, H*W).  No big transposes anywhere.
    x_flat = x_nchw.reshape(N, Cin, HW)

    # Halo rows (row above / below each row-block); clamped at the image edge,
    # the kernel zeroes them there to reproduce the conv's zero padding.
    tiles = jnp.arange(num_tiles)
    top_idx = jnp.maximum(tiles * TR - 1, 0)
    bot_idx = jnp.minimum((tiles + 1) * TR, H - 1)
    halo_top = jnp.transpose(x_nchw[:, :, top_idx, :], (0, 2, 1, 3))  # (N, nt, Cin, W)
    halo_bot = jnp.transpose(x_nchw[:, :, bot_idx, :], (0, 2, 1, 3))  # (N, nt, Cin, W)

    # MXU co-issues with the VALU-bound depthwise work, so a low cutoff pays.
    use_mxu = min(Cin, Cmid) >= 8

    kernel = functools.partial(ghost_kernel, W=W, tile_rows=TR, use_mxu=use_mxu)

    out = pl.pallas_call(
        kernel,
        out_shape=jax.ShapeDtypeStruct((N, out_channels, HW), x_nchw.dtype),
        grid_spec=pltpu.PrefetchScalarGridSpec(
            num_scalar_prefetch=0,
            grid=(N, num_tiles),
            in_specs=[
                pl.BlockSpec((None, Cin, TRW), lambda n, t: (n, 0, t)),
                pl.BlockSpec((None, None, Cin, W), lambda n, t: (n, t, 0, 0)),
                pl.BlockSpec((None, None, Cin, W), lambda n, t: (n, t, 0, 0)),
                pl.BlockSpec((Cmid, Cin), lambda n, t: (0, 0)),
                pl.BlockSpec((Cmid, 1), lambda n, t: (0, 0)),
                pl.BlockSpec((Cmid, 1), lambda n, t: (0, 0)),
                pl.BlockSpec((Cmid, 9), lambda n, t: (0, 0)),
                pl.BlockSpec((Cmid, 1), lambda n, t: (0, 0)),
                pl.BlockSpec((Cmid, 1), lambda n, t: (0, 0)),
            ],
            out_specs=pl.BlockSpec((None, out_channels, TRW),
                                   lambda n, t: (n, 0, t)),
        ),
        compiler_params=pltpu.CompilerParams(
            dimension_semantics=("parallel", "parallel"),
            vmem_limit_bytes=48 * 1024 * 1024),
    )(x_flat, halo_top, halo_bot, w1, s1, b1, wdw, s2, b2)

    return out.reshape(N, out_channels, H, W)


def fold_bn(gamma, beta, mean, var, eps=1e-5):
    scale = gamma / jnp.sqrt(var + eps)
    shift = beta - mean * scale
    return scale, shift


def init_ghost_params(key, in_channels, out_channels, ratio=2, dw_size=3):
    init_channels = math.ceil(out_channels / ratio)
    new_channels = init_channels * (ratio - 1)
    assert ratio == 2, "kernel assumes ratio=2 (pure depthwise cheap_operation)"
    assert dw_size == 3

    ks = jax.random.split(key, 10)
    conv1_w = 0.1 * jax.random.normal(
        ks[0], (init_channels, in_channels, 1, 1), jnp.float32)
    dw_w = 0.1 * jax.random.normal(
        ks[1], (new_channels, 1, dw_size, dw_size), jnp.float32)

    g1 = 1.0 + 0.1 * jax.random.normal(ks[2], (init_channels,), jnp.float32)
    beta1 = 0.1 * jax.random.normal(ks[3], (init_channels,), jnp.float32)
    mean1 = 0.1 * jax.random.normal(ks[4], (init_channels,), jnp.float32)
    var1 = 1.0 + 0.1 * jnp.abs(
        jax.random.normal(ks[5], (init_channels,), jnp.float32))

    g2 = 1.0 + 0.1 * jax.random.normal(ks[6], (new_channels,), jnp.float32)
    beta2 = 0.1 * jax.random.normal(ks[7], (new_channels,), jnp.float32)
    mean2 = 0.1 * jax.random.normal(ks[8], (new_channels,), jnp.float32)
    var2 = 1.0 + 0.1 * jnp.abs(
        jax.random.normal(ks[9], (new_channels,), jnp.float32))

    s1, b1 = fold_bn(g1, beta1, mean1, var1)
    s2, b2 = fold_bn(g2, beta2, mean2, var2)

    params = {
        "w1": conv1_w[:, :, 0, 0],                               # (Cmid, Cin)
        "s1": s1.reshape(-1, 1), "b1": b1.reshape(-1, 1),
        "wdw": dw_w[:, 0].reshape(new_channels, 9),              # (Cmid, 9)
        "s2": s2.reshape(-1, 1), "b2": b2.reshape(-1, 1),
    }
    raw = {"conv1_w": conv1_w, "dw_w": dw_w,
           "s1": s1, "b1": b1, "s2": s2, "b2": b2}
    return params, raw


def ghost_reference(x_nchw, raw, out_channels):
    """Pure-JAX reference (same math, NCHW) for correctness checking."""
    N, Cin, H, W = x_nchw.shape
    conv1_w, dw_w = raw["conv1_w"], raw["dw_w"]
    x1 = jnp.einsum("nchw,oc->nohw", x_nchw, conv1_w[:, :, 0, 0])
    x1 = jnp.maximum(x1, 0.0)
    x1 = x1 * raw["s1"][None, :, None, None] + raw["b1"][None, :, None, None]

    xp = jnp.pad(x1, ((0, 0), (0, 0), (1, 1), (1, 1)))
    x2 = jnp.zeros_like(x1)
    for dy in range(3):
        for dx in range(3):
            x2 = x2 + xp[:, :, dy:dy + H, dx:dx + W] * \
                dw_w[:, 0, dy, dx][None, :, None, None]
    x2 = jnp.maximum(x2, 0.0)
    x2 = x2 * raw["s2"][None, :, None, None] + raw["b2"][None, :, None, None]

    return jnp.concatenate([x1, x2], axis=1)[:, :out_channels, :, :]


if __name__ == "__main__":
    N, Cin, H, W = 2, 4, 16, 16
    out_channels = 8

    key = jax.random.PRNGKey(0)
    kx, kp = jax.random.split(key)
    x = jax.random.normal(kx, (N, Cin, H, W), jnp.float32)

    params, raw = init_ghost_params(kp, Cin, out_channels)

    out = ghost_module_forward(x, params, out_channels)
    out = jax.block_until_ready(out)

    ref = ghost_reference(x, raw, out_channels)
    assert out.shape == (N, out_channels, H, W), out.shape
    assert jnp.allclose(out, ref, rtol=1e-4, atol=1e-4), \
        float(jnp.max(jnp.abs(out - ref)))

    print("KERNEL_OK")
</pallas_src>

<mosaic_0001>
module attributes {stable_mosaic.version = 11 : i64} {
  func.func @ghost_kernel(%arg0: i32, %arg1: i32, %arg2: memref<1x4x256xf32, #tpu.memory_space<vmem>>, %arg3: memref<1x1x4x16xf32, #tpu.memory_space<vmem>>, %arg4: memref<1x1x4x16xf32, #tpu.memory_space<vmem>>, %arg5: memref<4x4xf32, #tpu.memory_space<vmem>>, %arg6: memref<4x1xf32, #tpu.memory_space<vmem>>, %arg7: memref<4x1xf32, #tpu.memory_space<vmem>>, %arg8: memref<4x9xf32, #tpu.memory_space<vmem>>, %arg9: memref<4x1xf32, #tpu.memory_space<vmem>>, %arg10: memref<4x1xf32, #tpu.memory_space<vmem>>, %arg11: memref<1x8x256xf32, #tpu.memory_space<vmem>>) attributes {dimension_semantics = [#tpu.dimension_semantics<parallel>, #tpu.dimension_semantics<parallel>], iteration_bounds = array<i64: 2, 1>, scalar_prefetch = 0 : i64, scratch_operands = 0 : i64, tpu.core_type = #tpu.core_type<tc>, window_params = [{transform_indices = @transform_0, window_bounds = array<i64: 1, 4, 256>}, {transform_indices = @transform_1, window_bounds = array<i64: 1, 1, 4, 16>}, {transform_indices = @transform_2, window_bounds = array<i64: 1, 1, 4, 16>}, {pipeline_mode = #tpu.pipeline_mode<synchronous>, transform_indices = @transform_3, window_bounds = array<i64: 4, 4>}, {pipeline_mode = #tpu.pipeline_mode<synchronous>, transform_indices = @transform_4, window_bounds = array<i64: 4, 1>}, {pipeline_mode = #tpu.pipeline_mode<synchronous>, transform_indices = @transform_5, window_bounds = array<i64: 4, 1>}, {pipeline_mode = #tpu.pipeline_mode<synchronous>, transform_indices = @transform_6, window_bounds = array<i64: 4, 9>}, {pipeline_mode = #tpu.pipeline_mode<synchronous>, transform_indices = @transform_7, window_bounds = array<i64: 4, 1>}, {pipeline_mode = #tpu.pipeline_mode<synchronous>, transform_indices = @transform_8, window_bounds = array<i64: 4, 1>}, {transform_indices = @transform_9, window_bounds = array<i64: 1, 8, 256>}]} {
    %c0 = arith.constant 0 : index
    %c0_0 = arith.constant 0 : index
    %c0_1 = arith.constant 0 : index
    %c0_2 = arith.constant 0 : index
    %0 = vector.load %arg3[%c0, %c0_0, %c0_1, %c0_2] : memref<1x1x4x16xf32, #tpu.memory_space<vmem>>, vector<1x1x4x16xf32>
    %1 = vector.shape_cast %0 : vector<1x1x4x16xf32> to vector<4x16xf32>
    %c0_3 = arith.constant 0 : index
    %c0_4 = arith.constant 0 : index
    %c0_5 = arith.constant 0 : index
    %2 = vector.load %arg2[%c0_3, %c0_4, %c0_5] : memref<1x4x256xf32, #tpu.memory_space<vmem>>, vector<1x4x256xf32>
    %3 = vector.shape_cast %2 : vector<1x4x256xf32> to vector<4x256xf32>
    %c0_6 = arith.constant 0 : index
    %c0_7 = arith.constant 0 : index
    %c0_8 = arith.constant 0 : index
    %c0_9 = arith.constant 0 : index
    %4 = vector.load %arg4[%c0_6, %c0_7, %c0_8, %c0_9] : memref<1x1x4x16xf32, #tpu.memory_space<vmem>>, vector<1x1x4x16xf32>
    %5 = vector.shape_cast %4 : vector<1x1x4x16xf32> to vector<4x16xf32>
    %6 = tpu.concatenate %1, %3, %5 in 1 : vector<4x16xf32>, vector<4x256xf32>, vector<4x16xf32> -> vector<4x288xf32>
    %c0_10 = arith.constant 0 : index
    %c0_11 = arith.constant 0 : index
    %7 = vector.load %arg5[%c0_10, %c0_11] : memref<4x4xf32, #tpu.memory_space<vmem>>, vector<4x4xf32>
    %8 = vector.extract_strided_slice %7 {offsets = [0, 0], sizes = [4, 1], strides = [1, 1]} : vector<4x4xf32> to vector<4x1xf32>
    %9 = vector.extract_strided_slice %6 {offsets = [0, 0], sizes = [1, 288], strides = [1, 1]} : vector<4x288xf32> to vector<1x288xf32>
    %10 = vector.broadcast %8 : vector<4x1xf32> to vector<4x288xf32>
    %11 = vector.broadcast %9 : vector<1x288xf32> to vector<4x288xf32>
    %12 = arith.mulf %10, %11 : vector<4x288xf32>
    %13 = vector.extract_strided_slice %7 {offsets = [0, 1], sizes = [4, 1], strides = [1, 1]} : vector<4x4xf32> to vector<4x1xf32>
    %14 = vector.extract_strided_slice %6 {offsets = [1, 0], sizes = [1, 288], strides = [1, 1]} : vector<4x288xf32> to vector<1x288xf32>
    %15 = vector.broadcast %13 : vector<4x1xf32> to vector<4x288xf32>
    %16 = vector.broadcast %14 : vector<1x288xf32> to vector<4x288xf32>
    %17 = arith.mulf %15, %16 : vector<4x288xf32>
    %18 = vector.extract_strided_slice %7 {offsets = [0, 2], sizes = [4, 1], strides = [1, 1]} : vector<4x4xf32> to vector<4x1xf32>
    %19 = vector.extract_strided_slice %6 {offsets = [2, 0], sizes = [1, 288], strides = [1, 1]} : vector<4x288xf32> to vector<1x288xf32>
    %20 = vector.broadcast %18 : vector<4x1xf32> to vector<4x288xf32>
    %21 = vector.broadcast %19 : vector<1x288xf32> to vector<4x288xf32>
    %22 = arith.mulf %20, %21 : vector<4x288xf32>
    %23 = vector.extract_strided_slice %7 {offsets = [0, 3], sizes = [4, 1], strides = [1, 1]} : vector<4x4xf32> to vector<4x1xf32>
    %24 = vector.extract_strided_slice %6 {offsets = [3, 0], sizes = [1, 288], strides = [1, 1]} : vector<4x288xf32> to vector<1x288xf32>
    %25 = vector.broadcast %23 : vector<4x1xf32> to vector<4x288xf32>
    %26 = vector.broadcast %24 : vector<1x288xf32> to vector<4x288xf32>
    %27 = arith.mulf %25, %26 : vector<4x288xf32>
    %28 = arith.addf %12, %17 : vector<4x288xf32>
    %29 = arith.addf %28, %22 : vector<4x288xf32>
    %30 = arith.addf %29, %27 : vector<4x288xf32>
    %cst = arith.constant 0.000000e+00 : f32
    %31 = vector.broadcast %cst : f32 to vector<4x288xf32>
    %32 = arith.maximumf %30, %31 : vector<4x288xf32>
    %c0_12 = arith.constant 0 : index
    %c0_13 = arith.constant 0 : index
    %33 = vector.load %arg6[%c0_12, %c0_13] : memref<4x1xf32, #tpu.memory_space<vmem>>, vector<4x1xf32>
    %34 = vector.broadcast %33 : vector<4x1xf32> to vector<4x288xf32>
    %35 = arith.mulf %32, %34 : vector<4x288xf32>
    %c0_14 = arith.constant 0 : index
    %c0_15 = arith.constant 0 : index
    %36 = vector.load %arg7[%c0_14, %c0_15] : memref<4x1xf32, #tpu.memory_space<vmem>>, vector<4x1xf32>
    %37 = vector.broadcast %36 : vector<4x1xf32> to vector<4x288xf32>
    %38 = arith.addf %35, %37 : vector<4x288xf32>
    %39 = tpu.iota {dimensions = array<i32: 1>} : vector<1x288xi32>
    %c0_i32 = arith.constant 0 : i32
    %40 = arith.cmpi sgt, %arg1, %c0_i32 : i32
    %cst_16 = arith.constant 1.000000e+00 : f32
    %cst_17 = arith.constant 0.000000e+00 : f32
    %41 = arith.select %40, %cst_16, %cst_17 : f32
    %c0_i32_18 = arith.constant 0 : i32
    %42 = arith.cmpi slt, %arg1, %c0_i32_18 : i32
    %cst_19 = arith.constant 1.000000e+00 : f32
    %cst_20 = arith.constant 0.000000e+00 : f32
    %43 = arith.select %42, %cst_19, %cst_20 : f32
    %c16_i32 = arith.constant 16 : i32
    %44 = vector.broadcast %c16_i32 : i32 to vector<1x288xi32>
    %45 = arith.cmpi slt, %39, %44 : vector<1x288xi32>
    %c272_i32 = arith.constant 272 : i32
    %46 = vector.broadcast %c272_i32 : i32 to vector<1x288xi32>
    %47 = arith.cmpi sge, %39, %46 : vector<1x288xi32>
    %cst_21 = arith.constant 1.000000e+00 : f32
    %48 = vector.broadcast %43 : f32 to vector<1x288xf32>
    %49 = vector.broadcast %cst_21 : f32 to vector<1x288xf32>
    %50 = arith.select %47, %48, %49 : vector<1x288xi1>, vector<1x288xf32>
    %51 = vector.broadcast %41 : f32 to vector<1x288xf32>
    %52 = arith.select %45, %51, %50 : vector<1x288xi1>, vector<1x288xf32>
    %53 = vector.broadcast %52 : vector<1x288xf32> to vector<4x288xf32>
    %54 = arith.mulf %38, %53 : vector<4x288xf32>
    %cst_22 = arith.constant 0.000000e+00 : f32
    %55 = vector.broadcast %cst_22 : f32 to vector<4x1xf32>
    %56 = tpu.concatenate %55, %54, %55 in 1 : vector<4x1xf32>, vector<4x288xf32>, vector<4x1xf32> -> vector<4x290xf32>
    %57 = tpu.iota {dimensions = array<i32: 1>} : vector<1x290xi32>
    %c15_i32 = arith.constant 15 : i32
    %58 = vector.broadcast %c15_i32 : i32 to vector<1x290xi32>
    %59 = arith.addi %57, %58 : vector<1x290xi32>
    %c16_i32_23 = arith.constant 16 : i32
    %c0_i32_24 = arith.constant 0 : i32
    %60 = arith.cmpi eq, %c16_i32_23, %c0_i32_24 : i32
    %c1_i32 = arith.constant 1 : i32
    %61 = arith.select %60, %c1_i32, %c16_i32_23 : i32
    %62 = vector.broadcast %61 : i32 to vector<1x290xi32>
    %63 = arith.remsi %59, %62 : vector<1x290xi32>
    %c0_i32_25 = arith.constant 0 : i32
    %64 = vector.broadcast %c0_i32_25 : i32 to vector<1x290xi32>
    %65 = arith.cmpi ne, %63, %64 : vector<1x290xi32>
    %c0_i32_26 = arith.constant 0 : i32
    %66 = vector.broadcast %c0_i32_26 : i32 to vector<1x290xi32>
    %67 = arith.cmpi slt, %63, %66 : vector<1x290xi32>
    %c0_i32_27 = arith.constant 0 : i32
    %68 = arith.cmpi slt, %61, %c0_i32_27 : i32
    %69 = vector.broadcast %68 : i1 to vector<1x290xi1>
    %70 = vector.broadcast %69 : vector<1x290xi1> to vector<1x290xi1>
    %71 = arith.xori %67, %70 : vector<1x290xi1>
    %72 = arith.andi %71, %65 : vector<1x290xi1>
    %73 = vector.broadcast %61 : i32 to vector<1x290xi32>
    %74 = arith.addi %63, %73 : vector<1x290xi32>
    %75 = arith.select %72, %74, %63 : vector<1x290xi1>, vector<1x290xi32>
    %c15_i32_28 = arith.constant 15 : i32
    %76 = vector.broadcast %c15_i32_28 : i32 to vector<1x290xi32>
    %77 = arith.cmpi eq, %75, %76 : vector<1x290xi32>
    %cst_29 = arith.constant 0.000000e+00 : f32
    %78 = vector.shape_cast %77 : vector<1x290xi1> to vector<1x290xi1>
    %79 = vector.broadcast %78 : vector<1x290xi1> to vector<4x290xi1>
    %80 = vector.broadcast %cst_29 : f32 to vector<4x290xf32>
    %81 = arith.select %79, %80, %56 : vector<4x290xi1>, vector<4x290xf32>
    %c0_i32_30 = arith.constant 0 : i32
    %82 = vector.broadcast %c0_i32_30 : i32 to vector<1x290xi32>
    %83 = arith.cmpi eq, %75, %82 : vector<1x290xi32>
    %cst_31 = arith.constant 0.000000e+00 : f32
    %84 = vector.shape_cast %83 : vector<1x290xi1> to vector<1x290xi1>
    %85 = vector.broadcast %84 : vector<1x290xi1> to vector<4x290xi1>
    %86 = vector.broadcast %cst_31 : f32 to vector<4x290xf32>
    %87 = arith.select %85, %86, %56 : vector<4x290xi1>, vector<4x290xf32>
    %c0_32 = arith.constant 0 : index
    %c0_33 = arith.constant 0 : index
    %88 = vector.load %arg8[%c0_32, %c0_33] : memref<4x9xf32, #tpu.memory_space<vmem>>, vector<4x9xf32>
    %89 = vector.extract_strided_slice %81 {offsets = [0, 0], sizes = [4, 256], strides = [1, 1]} : vector<4x290xf32> to vector<4x256xf32>
    %90 = vector.extract_strided_slice %88 {offsets = [0, 0], sizes = [4, 1], strides = [1, 1]} : vector<4x9xf32> to vector<4x1xf32>
    %91 = vector.broadcast %90 : vector<4x1xf32> to vector<4x256xf32>
    %92 = arith.mulf %91, %89 : vector<4x256xf32>
    %93 = vector.extract_strided_slice %56 {offsets = [0, 1], sizes = [4, 256], strides = [1, 1]} : vector<4x290xf32> to vector<4x256xf32>
    %94 = vector.extract_strided_slice %88 {offsets = [0, 1], sizes = [4, 1], strides = [1, 1]} : vector<4x9xf32> to vector<4x1xf32>
    %95 = vector.broadcast %94 : vector<4x1xf32> to vector<4x256xf32>
    %96 = arith.mulf %95, %93 : vector<4x256xf32>
    %97 = vector.extract_strided_slice %87 {offsets = [0, 2], sizes = [4, 256], strides = [1, 1]} : vector<4x290xf32> to vector<4x256xf32>
    %98 = vector.extract_strided_slice %88 {offsets = [0, 2], sizes = [4, 1], strides = [1, 1]} : vector<4x9xf32> to vector<4x1xf32>
    %99 = vector.broadcast %98 : vector<4x1xf32> to vector<4x256xf32>
    %100 = arith.mulf %99, %97 : vector<4x256xf32>
    %101 = vector.extract_strided_slice %81 {offsets = [0, 16], sizes = [4, 256], strides = [1, 1]} : vector<4x290xf32> to vector<4x256xf32>
    %102 = vector.extract_strided_slice %88 {offsets = [0, 3], sizes = [4, 1], strides = [1, 1]} : vector<4x9xf32> to vector<4x1xf32>
    %103 = vector.broadcast %102 : vector<4x1xf32> to vector<4x256xf32>
    %104 = arith.mulf %103, %101 : vector<4x256xf32>
    %105 = arith.addf %92, %104 : vector<4x256xf32>
    %106 = vector.extract_strided_slice %56 {offsets = [0, 17], sizes = [4, 256], strides = [1, 1]} : vector<4x290xf32> to vector<4x256xf32>
    %107 = vector.extract_strided_slice %88 {offsets = [0, 4], sizes = [4, 1], strides = [1, 1]} : vector<4x9xf32> to vector<4x1xf32>
    %108 = vector.broadcast %107 : vector<4x1xf32> to vector<4x256xf32>
    %109 = arith.mulf %108, %106 : vector<4x256xf32>
    %110 = arith.addf %96, %109 : vector<4x256xf32>
    %111 = vector.extract_strided_slice %87 {offsets = [0, 18], sizes = [4, 256], strides = [1, 1]} : vector<4x290xf32> to vector<4x256xf32>
    %112 = vector.extract_strided_slice %88 {offsets = [0, 5], sizes = [4, 1], strides = [1, 1]} : vector<4x9xf32> to vector<4x1xf32>
    %113 = vector.broadcast %112 : vector<4x1xf32> to vector<4x256xf32>
    %114 = arith.mulf %113, %111 : vector<4x256xf32>
    %115 = arith.addf %100, %114 : vector<4x256xf32>
    %116 = vector.extract_strided_slice %81 {offsets = [0, 32], sizes = [4, 256], strides = [1, 1]} : vector<4x290xf32> to vector<4x256xf32>
    %117 = vector.extract_strided_slice %88 {offsets = [0, 6], sizes = [4, 1], strides = [1, 1]} : vector<4x9xf32> to vector<4x1xf32>
    %118 = vector.broadcast %117 : vector<4x1xf32> to vector<4x256xf32>
    %119 = arith.mulf %118, %116 : vector<4x256xf32>
    %120 = arith.addf %105, %119 : vector<4x256xf32>
    %121 = vector.extract_strided_slice %56 {offsets = [0, 33], sizes = [4, 256], strides = [1, 1]} : vector<4x290xf32> to vector<4x256xf32>
    %122 = vector.extract_strided_slice %88 {offsets = [0, 7], sizes = [4, 1], strides = [1, 1]} : vector<4x9xf32> to vector<4x1xf32>
    %123 = vector.broadcast %122 : vector<4x1xf32> to vector<4x256xf32>
    %124 = arith.mulf %123, %121 : vector<4x256xf32>
    %125 = arith.addf %110, %124 : vector<4x256xf32>
    %126 = vector.extract_strided_slice %87 {offsets = [0, 34], sizes = [4, 256], strides = [1, 1]} : vector<4x290xf32> to vector<4x256xf32>
    %127 = vector.extract_strided_slice %88 {offsets = [0, 8], sizes = [4, 1], strides = [1, 1]} : vector<4x9xf32> to vector<4x1xf32>
    %128 = vector.broadcast %127 : vector<4x1xf32> to vector<4x256xf32>
    %129 = arith.mulf %128, %126 : vector<4x256xf32>
    %130 = arith.addf %115, %129 : vector<4x256xf32>
    %131 = arith.addf %120, %125 : vector<4x256xf32>
    %132 = arith.addf %131, %130 : vector<4x256xf32>
    %cst_34 = arith.constant 0.000000e+00 : f32
    %133 = vector.broadcast %cst_34 : f32 to vector<4x256xf32>
    %134 = arith.maximumf %132, %133 : vector<4x256xf32>
    %c0_35 = arith.constant 0 : index
    %c0_36 = arith.constant 0 : index
    %135 = vector.load %arg9[%c0_35, %c0_36] : memref<4x1xf32, #tpu.memory_space<vmem>>, vector<4x1xf32>
    %136 = vector.broadcast %135 : vector<4x1xf32> to vector<4x256xf32>
    %137 = arith.mulf %134, %136 : vector<4x256xf32>
    %c0_37 = arith.constant 0 : index
    %c0_38 = arith.constant 0 : index
    %138 = vector.load %arg10[%c0_37, %c0_38] : memref<4x1xf32, #tpu.memory_space<vmem>>, vector<4x1xf32>
    %139 = vector.broadcast %138 : vector<4x1xf32> to vector<4x256xf32>
    %140 = arith.addf %137, %139 : vector<4x256xf32>
    %141 = vector.extract_strided_slice %54 {offsets = [0, 16], sizes = [4, 256], strides = [1, 1]} : vector<4x288xf32> to vector<4x256xf32>
    %142 = tpu.concatenate %141, %140 in 0 : vector<4x256xf32>, vector<4x256xf32> -> vector<8x256xf32>
    %c0_39 = arith.constant 0 : index
    %c0_40 = arith.constant 0 : index
    %c0_41 = arith.constant 0 : index
    %143 = vector.load %arg11[%c0_39, %c0_40, %c0_41] : memref<1x8x256xf32, #tpu.memory_space<vmem>>, vector<1x8x256xf32>
    %144 = vector.shape_cast %143 : vector<1x8x256xf32> to vector<8x256xf32>
    %145 = vector.shape_cast %142 : vector<8x256xf32> to vector<1x8x256xf32>
    tpu.vector_store %arg11[%c0_39, %c0_40, %c0_41], %145 {strides = array<i32>} : memref<1x8x256xf32, #tpu.memory_space<vmem>>, vector<1x8x256xf32>,
    return
  }
  func.func @transform_0(%arg0: i32, %arg1: i32) -> (i32, i32, i32) {
    %c0_i32 = arith.constant 0 : i32
    %c0_i32_0 = arith.constant 0 : i32
    return %arg0, %c0_i32, %arg1 : i32, i32, i32
  }
  func.func @transform_1(%arg0: i32, %arg1: i32) -> (i32, i32, i32, i32) {
    %c0_i32 = arith.constant 0 : i32
    %c0_i32_0 = arith.constant 0 : i32
    %c0_i32_1 = arith.constant 0 : i32
    return %arg0, %arg1, %c0_i32, %c0_i32_0 : i32, i32, i32, i32
  }
  func.func @transform_2(%arg0: i32, %arg1: i32) -> (i32, i32, i32, i32) {
    %c0_i32 = arith.constant 0 : i32
    %c0_i32_0 = arith.constant 0 : i32
    %c0_i32_1 = arith.constant 0 : i32
    return %arg0, %arg1, %c0_i32, %c0_i32_0 : i32, i32, i32, i32
  }
  func.func @transform_3(%arg0: i32, %arg1: i32) -> (i32, i32) {
    %c0_i32 = arith.constant 0 : i32
    %c0_i32_0 = arith.constant 0 : i32
    %c0_i32_1 = arith.constant 0 : i32
    return %c0_i32, %c0_i32_0 : i32, i32
  }
  func.func @transform_4(%arg0: i32, %arg1: i32) -> (i32, i32) {
    %c0_i32 = arith.constant 0 : i32
    %c0_i32_0 = arith.constant 0 : i32
    %c0_i32_1 = arith.constant 0 : i32
    return %c0_i32, %c0_i32_0 : i32, i32
  }
  func.func @transform_5(%arg0: i32, %arg1: i32) -> (i32, i32) {
    %c0_i32 = arith.constant 0 : i32
    %c0_i32_0 = arith.constant 0 : i32
    %c0_i32_1 = arith.constant 0 : i32
    return %c0_i32, %c0_i32_0 : i32, i32
  }
  func.func @transform_6(%arg0: i32, %arg1: i32) -> (i32, i32) {
    %c0_i32 = arith.constant 0 : i32
    %c0_i32_0 = arith.constant 0 : i32
    %c0_i32_1 = arith.constant 0 : i32
    return %c0_i32, %c0_i32_0 : i32, i32
  }
  func.func @transform_7(%arg0: i32, %arg1: i32) -> (i32, i32) {
    %c0_i32 = arith.constant 0 : i32
    %c0_i32_0 = arith.constant 0 : i32
    %c0_i32_1 = arith.constant 0 : i32
    return %c0_i32, %c0_i32_0 : i32, i32
  }
  func.func @transform_8(%arg0: i32, %arg1: i32) -> (i32, i32) {
    %c0_i32 = arith.constant 0 : i32
    %c0_i32_0 = arith.constant 0 : i32
    %c0_i32_1 = arith.constant 0 : i32
    return %c0_i32, %c0_i32_0 : i32, i32
  }
  func.func @transform_9(%arg0: i32, %arg1: i32) -> (i32, i32, i32) {
    %c0_i32 = arith.constant 0 : i32
    %c0_i32_0 = arith.constant 0 : i32
    return %arg0, %c0_i32, %arg1 : i32, i32, i32
  }
}

</mosaic_0001>

<llo_original>
// kernel: tpu_custom_call.1
$region0: #{tpu_custom_call.1}
  #allocation0 [shape = 'u32[]', space=smem, size = 0x4, offset = 0x4, fixed_abs, tag = 'smem constant byte address 0x4 - core index']
  #allocation1 [shape = 'u32[144,128]{1,0:T(1,128)}', space=vmem, size = 0x12000, scoped, tag = 'internal scratch']
  %s0 = inlined_call_operand.vmem [shape: f32[2,4,256], index: 0, kind: input, shape index: {}]
  %s1 = inlined_call_operand.hbm [shape: f32[2,1,4,16], index: 1, kind: input, shape index: {}]
  %s2 = inlined_call_operand.hbm [shape: f32[2,1,4,16], index: 2, kind: input, shape index: {}]
  %s3 = inlined_call_operand.vmem [shape: f32[4,4], index: 3, kind: input, shape index: {}]
  %s4 = inlined_call_operand.vmem [shape: f32[4,1], index: 4, kind: input, shape index: {}]
  %s5 = inlined_call_operand.vmem [shape: f32[4,1], index: 5, kind: input, shape index: {}]
  %s6 = inlined_call_operand.vmem [shape: f32[4,9], index: 6, kind: input, shape index: {}]
  %s7 = inlined_call_operand.vmem [shape: f32[4,1], index: 7, kind: input, shape index: {}]
  %s8 = inlined_call_operand.vmem [shape: f32[4,1], index: 8, kind: input, shape index: {}]
  %s9 = inlined_call_operand.hbm [shape: f32[2,8,256], index: 9, kind: output, shape index: {}]
  %s10 = sld [smem:[#allocation0]]
  $region77: #{tpu_custom_call.1} parent=0
    _
  %s12 = ssub.s32 1, %s10
  %s13 = scalar_select 0, %s12, %s10
  $region1: #{tpu_custom_call.1} parent=0
    #allocation2 [shape = 'u8[4096]{0}', space=vmem, size = 0x1000, scoped, tag = 'input window, operand 1']
    #allocation3 [shape = 's32[2]{0}', space=sflag, size = 0x8, scoped, tag = 'scoped memory for tpu_custom_call.1']
    #allocation4 [shape = 's32[2]{0}', space=sflag, size = 0x8, scoped, tag = 'scoped memory for tpu_custom_call.1']
    #allocation5 [shape = 'u8[4096]{0}', space=vmem, size = 0x1000, scoped, tag = 'input window, operand 2']
    #allocation6 [shape = 's32[2]{0}', space=sflag, size = 0x8, scoped, tag = 'scoped memory for tpu_custom_call.1']
    #allocation7 [shape = 'u8[16384]{0}', space=vmem, size = 0x4000, scoped, tag = 'output window, operand 0']
    %14 = vsyncpa [#allocation3], 0
    %s15 = scalar_lea.sflag [#allocation3], 1
    %16 = vsyncpa %s15, 0
    %17 = vsyncpa [#allocation6], 0
    %s18 = scalar_lea.sflag [#allocation6], 1
    %19 = vsyncpa %s18, 0
    %20 = vsyncpa [#allocation4], 0
    %s21 = scalar_lea.sflag [#allocation4], 1
    %22 = vsyncpa %s21, 0
    loop: start=0, step=1, limit=4
    $region2: #{tpu_custom_call.1} parent=1 // loop_pre_header
      _
    $region3: #{tpu_custom_call.1} parent=1 // loop_header
      %s24 = sphi 0, %s28
      %p25 = scmp.ge.s32.totalorder %s24, 4
      %s31 = sphi 0, %s43
      %s32 = sphi 0, %s39
      %s33 = sphi 0, %s31
      %s34 = sphi 0, %s32
      %s35 = sphi 0, %s33
      %s36 = sphi 0, %s34
      %s48 = sphi 0, %s50
      %s51 = sphi 0, %s48
      %s52 = sphi 0, %s51
      %s68 = sphi 0, %s52
      %s76 = sphi 0, %s78
      %s79 = sphi 0, %s76
      %s80 = sphi 0, %s79
      %s96 = sphi 0, %s80
      %s104 = sphi 0, %s106
      %s107 = sphi 0, %s104
      %s108 = sphi 0, %s107
      %s124 = sphi 0, %s108
      %s128 = sphi 0, %s128
      %s130 = sphi 0, %s128
      %s131 = sphi 0, %s130
      %s145 = sphi 0, %s131
      %s149 = sphi 0, %s149
      %s151 = sphi 0, %s149
      %s152 = sphi 0, %s151
      %s166 = sphi 0, %s152
      %s170 = sphi 0, %s170
      %s172 = sphi 0, %s170
      %s173 = sphi 0, %s172
      %s187 = sphi 0, %s173
      %s191 = sphi 0, %s191
      %s193 = sphi 0, %s191
      %s194 = sphi 0, %s193
      %s208 = sphi 0, %s194
      %s212 = sphi 0, %s212
      %s214 = sphi 0, %s212
      %s215 = sphi 0, %s214
      %s229 = sphi 0, %s215
      %s233 = sphi 0, %s233
      %s235 = sphi 0, %s233
      %s236 = sphi 0, %s235
      %s250 = sphi 0, %s236
      %s258 = sphi 0, %s260
      %s261 = sphi 0, %s258
      %s262 = sphi 0, %s261
      %s278 = sphi 0, %s262
    $region4: #{tpu_custom_call.1} parent=1 // loop_header_branch
      %27 = sbr.rel (%p25) target = $region8
    $region5: #{tpu_custom_call.1} parent=1 // loop_body
      %s29 = ssub.s32 %s24, 1
      %s30 = ssub.s32 %s24, 2
      %s37 = sadd.s32 1, %s32
      %p38 = scmp.ge.s32.totalorder %s37, 1
      %s39 = scalar_select %p38, 0, %s37
      %s40 = sadd.s32 1, %s31
      %s41 = scalar_select %p38, %s40, %s31
      %p42 = scmp.ge.s32.totalorder %s41, 2
      %s43 = scalar_select %p42, 0, %s41
      %s44 = ssub.s32 %s31, %s43
      %s45 = ssub.s32 %s32, %s39
      %s46 = sor.u32 %s44, %s45
      %p47 = scmp.eq.s32.totalorder %s46, 0
      %s49 = sadd.s32 %s48, 1
      %s50 = scalar_select %p47, %s48, %s49
      %p53 = pneg %p47
      %p54 = scmp.eq.s32.totalorder %s24, 1
      %p55 = por %p53, %p54
      %p56 = scmp.ne.s32.totalorder %s48, %s51
      %p57 = scmp.eq.s32.totalorder %s24, 0
      %p58 = por %p56, %p57
      %p59 = scmp.ne.s32.totalorder %s48, %s51
      %p60 = scmp.eq.s32.totalorder %s29, 1
      %p61 = por %p59, %p60
      %p62 = scmp.ne.s32.totalorder %s51, %s52
      %p63 = scmp.eq.s32.totalorder %s29, 0
      %p64 = por %p62, %p63
      %p65 = scmp.ne.s32.totalorder %s51, %s52
      %p66 = scmp.eq.s32.totalorder %s30, 1
      %p67 = por %p65, %p66
      %p69 = scmp.ne.s32.totalorder %s52, %s68
      %p70 = scmp.eq.s32.totalorder %s30, 0
      %p71 = por %p69, %p70
      %s72 = ssub.s32 %s31, %s43
      %s73 = ssub.s32 %s32, %s39
      %s74 = sor.u32 %s72, %s73
      %p75 = scmp.eq.s32.totalorder %s74, 0
      %s77 = sadd.s32 %s76, 1
      %s78 = scalar_select %p75, %s76, %s77
      %p81 = pneg %p75
      %p82 = scmp.eq.s32.totalorder %s24, 1
      %p83 = por %p81, %p82
      %p84 = scmp.ne.s32.totalorder %s76, %s79
      %p85 = scmp.eq.s32.totalorder %s24, 0
      %p86 = por %p84, %p85
      %p87 = scmp.ne.s32.totalorder %s76, %s79
      %p88 = scmp.eq.s32.totalorder %s29, 1
      %p89 = por %p87, %p88
      %p90 = scmp.ne.s32.totalorder %s79, %s80
      %p91 = scmp.eq.s32.totalorder %s29, 0
      %p92 = por %p90, %p91
      %p93 = scmp.ne.s32.totalorder %s79, %s80
      %p94 = scmp.eq.s32.totalorder %s30, 1
      %p95 = por %p93, %p94
      %p97 = scmp.ne.s32.totalorder %s80, %s96
      %p98 = scmp.eq.s32.totalorder %s30, 0
      %p99 = por %p97, %p98
      %s100 = ssub.s32 %s31, %s43
      %s101 = ssub.s32 %s32, %s39
      %s102 = sor.u32 %s100, %s101
      %p103 = scmp.eq.s32.totalorder %s102, 0
      %s105 = sadd.s32 %s104, 1
      %s106 = scalar_select %p103, %s104, %s105
      %p109 = pneg %p103
      %p110 = scmp.eq.s32.totalorder %s24, 1
      %p111 = por %p109, %p110
      %p112 = scmp.ne.s32.totalorder %s104, %s107
      %p113 = scmp.eq.s32.totalorder %s24, 0
      %p114 = por %p112, %p113
      %p115 = scmp.ne.s32.totalorder %s104, %s107
      %p116 = scmp.eq.s32.totalorder %s29, 1
      %p117 = por %p115, %p116
      %p118 = scmp.ne.s32.totalorder %s107, %s108
      %p119 = scmp.eq.s32.totalorder %s29, 0
      %p120 = por %p118, %p119
      %p121 = scmp.ne.s32.totalorder %s107, %s108
      %p122 = scmp.eq.s32.totalorder %s30, 1
      %p123 = por %p121, %p122
      %p125 = scmp.ne.s32.totalorder %s108, %s124
      %p126 = scmp.eq.s32.totalorder %s30, 0
      %p127 = por %p125, %p126
      %s129 = sadd.s32 %s128, 1
      %p132 = scmp.eq.s32.totalorder %s24, 1
      %p133 = scmp.ne.s32.totalorder %s128, %s130
      %p134 = scmp.eq.s32.totalorder %s24, 0
      %p135 = por %p133, %p134
      %p136 = scmp.ne.s32.totalorder %s128, %s130
      %p137 = scmp.eq.s32.totalorder %s29, 1
      %p138 = por %p136, %p137
      %p139 = scmp.ne.s32.totalorder %s130, %s131
      %p140 = scmp.eq.s32.totalorder %s29, 0
      %p141 = por %p139, %p140
      %p142 = scmp.ne.s32.totalorder %s130, %s131
      %p143 = scmp.eq.s32.totalorder %s30, 1
      %p144 = por %p142, %p143
      %p146 = scmp.ne.s32.totalorder %s131, %s145
      %p147 = scmp.eq.s32.totalorder %s30, 0
      %p148 = por %p146, %p147
      %s150 = sadd.s32 %s149, 1
      %p153 = scmp.eq.s32.totalorder %s24, 1
      %p154 = scmp.ne.s32.totalorder %s149, %s151
      %p155 = scmp.eq.s32.totalorder %s24, 0
      %p156 = por %p154, %p155
      %p157 = scmp.ne.s32.totalorder %s149, %s151
      %p158 = scmp.eq.s32.totalorder %s29, 1
      %p159 = por %p157, %p158
      %p160 = scmp.ne.s32.totalorder %s151, %s152
      %p161 = scmp.eq.s32.totalorder %s29, 0
      %p162 = por %p160, %p161
      %p163 = scmp.ne.s32.totalorder %s151, %s152
      %p164 = scmp.eq.s32.totalorder %s30, 1
      %p165 = por %p163, %p164
      %p167 = scmp.ne.s32.totalorder %s152, %s166
      %p168 = scmp.eq.s32.totalorder %s30, 0
      %p169 = por %p167, %p168
      %s171 = sadd.s32 %s170, 1
      %p174 = scmp.eq.s32.totalorder %s24, 1
      %p175 = scmp.ne.s32.totalorder %s170, %s172
      %p176 = scmp.eq.s32.totalorder %s24, 0
      %p177 = por %p175, %p176
      %p178 = scmp.ne.s32.totalorder %s170, %s172
      %p179 = scmp.eq.s32.totalorder %s29, 1
      %p180 = por %p178, %p179
      %p181 = scmp.ne.s32.totalorder %s172, %s173
      %p182 = scmp.eq.s32.totalorder %s29, 0
      %p183 = por %p181, %p182
      %p184 = scmp.ne.s32.totalorder %s172, %s173
      %p185 = scmp.eq.s32.totalorder %s30, 1
      %p186 = por %p184, %p185
      %p188 = scmp.ne.s32.totalorder %s173, %s187
      %p189 = scmp.eq.s32.totalorder %s30, 0
      %p190 = por %p188, %p189
      %s192 = sadd.s32 %s191, 1
      %p195 = scmp.eq.s32.totalorder %s24, 1
      %p196 = scmp.ne.s32.totalorder %s191, %s193
      %p197 = scmp.eq.s32.totalorder %s24, 0
      %p198 = por %p196, %p197
      %p199 = scmp.ne.s32.totalorder %s191, %s193
      %p200 = scmp.eq.s32.totalorder %s29, 1
      %p201 = por %p199, %p200
      %p202 = scmp.ne.s32.totalorder %s193, %s194
      %p203 = scmp.eq.s32.totalorder %s29, 0
      %p204 = por %p202, %p203
      %p205 = scmp.ne.s32.totalorder %s193, %s194
      %p206 = scmp.eq.s32.totalorder %s30, 1
      %p207 = por %p205, %p206
      %p209 = scmp.ne.s32.totalorder %s194, %s208
      %p210 = scmp.eq.s32.totalorder %s30, 0
      %p211 = por %p209, %p210
      %s213 = sadd.s32 %s212, 1
      %p216 = scmp.eq.s32.totalorder %s24, 1
      %p217 = scmp.ne.s32.totalorder %s212, %s214
      %p218 = scmp.eq.s32.totalorder %s24, 0
      %p219 = por %p217, %p218
      %p220 = scmp.ne.s32.totalorder %s212, %s214
      %p221 = scmp.eq.s32.totalorder %s29, 1
      %p222 = por %p220, %p221
      %p223 = scmp.ne.s32.totalorder %s214, %s215
      %p224 = scmp.eq.s32.totalorder %s29, 0
      %p225 = por %p223, %p224
      %p226 = scmp.ne.s32.totalorder %s214, %s215
      %p227 = scmp.eq.s32.totalorder %s30, 1
      %p228 = por %p226, %p227
      %p230 = scmp.ne.s32.totalorder %s215, %s229
      %p231 = scmp.eq.s32.totalorder %s30, 0
      %p232 = por %p230, %p231
      %s234 = sadd.s32 %s233, 1
      %p237 = scmp.eq.s32.totalorder %s24, 1
      %p238 = scmp.ne.s32.totalorder %s233, %s235
      %p239 = scmp.eq.s32.totalorder %s24, 0
      %p240 = por %p238, %p239
      %p241 = scmp.ne.s32.totalorder %s233, %s235
      %p242 = scmp.eq.s32.totalorder %s29, 1
      %p243 = por %p241, %p242
      %p244 = scmp.ne.s32.totalorder %s235, %s236
      %p245 = scmp.eq.s32.totalorder %s29, 0
      %p246 = por %p244, %p245
      %p247 = scmp.ne.s32.totalorder %s235, %s236
      %p248 = scmp.eq.s32.totalorder %s30, 1
      %p249 = por %p247, %p248
      %p251 = scmp.ne.s32.totalorder %s236, %s250
      %p252 = scmp.eq.s32.totalorder %s30, 0
      %p253 = por %p251, %p252
      %s254 = ssub.s32 %s31, %s43
      %s255 = ssub.s32 %s32, %s39
      %s256 = sor.u32 %s254, %s255
      %p257 = scmp.eq.s32.totalorder %s256, 0
      %s259 = sadd.s32 %s258, 1
      %s260 = scalar_select %p257, %s258, %s259
      %p263 = pneg %p257
      %p264 = scmp.eq.s32.totalorder %s24, 1
      %p265 = por %p263, %p264
      %p266 = scmp.ne.s32.totalorder %s258, %s261
      %p267 = scmp.eq.s32.totalorder %s24, 0
      %p268 = por %p266, %p267
      %p269 = scmp.ne.s32.totalorder %s258, %s261
      %p270 = scmp.eq.s32.totalorder %s29, 1
      %p271 = por %p269, %p270
      %p272 = scmp.ne.s32.totalorder %s261, %s262
      %p273 = scmp.eq.s32.totalorder %s29, 0
      %p274 = por %p272, %p273
      %p275 = scmp.ne.s32.totalorder %s261, %s262
      %p276 = scmp.eq.s32.totalorder %s30, 1
      %p277 = por %p275, %p276
      %p279 = scmp.ne.s32.totalorder %s262, %s278
      %p280 = scmp.eq.s32.totalorder %s30, 0
      %p281 = por %p279, %p280
      %p282 = scmp.le.s32.totalorder 1, %s24
      %p283 = scmp.lt.s32.totalorder %s24, 3
      %p284 = pnand %p282, %p283
      %p285 = pneg %p284
      // Predicated region
      $region9: #{tpu_custom_call.1} parent=5 // pred_check
        _
      $region10: #{tpu_custom_call.1} parent=5 // pred_check_branch
        %287 = sbr.rel (%p284) target = $region12
      $region11: #{tpu_custom_call.1} parent=5 // pred_region
        %s288 = ssub.s32 %s24, 1
        // Predicated region
        $region13: #{tpu_custom_call.1} parent=11 // pred_check
          %p289 = pneg %p141
        $region14: #{tpu_custom_call.1} parent=11 // pred_check_branch
          %291 = sbr.rel (%p289) target = $region16
        $region15: #{tpu_custom_call.1} parent=11 // pred_region
          _
        $region16: #{tpu_custom_call.1} parent=11 // pred_fallthru
          _
        // Predicated region
        $region17: #{tpu_custom_call.1} parent=11 // pred_check
          %p292 = pneg %p162
        $region18: #{tpu_custom_call.1} parent=11 // pred_check_branch
          %294 = sbr.rel (%p292) target = $region20
        $region19: #{tpu_custom_call.1} parent=11 // pred_region
          _
        $region20: #{tpu_custom_call.1} parent=11 // pred_fallthru
          _
        // Predicated region
        $region21: #{tpu_custom_call.1} parent=11 // pred_check
          %p295 = pneg %p183
        $region22: #{tpu_custom_call.1} parent=11 // pred_check_branch
          %297 = sbr.rel (%p295) target = $region24
        $region23: #{tpu_custom_call.1} parent=11 // pred_region
          _
        $region24: #{tpu_custom_call.1} parent=11 // pred_fallthru
          _
        // Predicated region
        $region25: #{tpu_custom_call.1} parent=11 // pred_check
          %p298 = pneg %p204
        $region26: #{tpu_custom_call.1} parent=11 // pred_check_branch
          %300 = sbr.rel (%p298) target = $region28
        $region27: #{tpu_custom_call.1} parent=11 // pred_region
          _
        $region28: #{tpu_custom_call.1} parent=11 // pred_fallthru
          _
        // Predicated region
        $region29: #{tpu_custom_call.1} parent=11 // pred_check
          %p301 = pneg %p225
        $region30: #{tpu_custom_call.1} parent=11 // pred_check_branch
          %303 = sbr.rel (%p301) target = $region32
        $region31: #{tpu_custom_call.1} parent=11 // pred_region
          _
        $region32: #{tpu_custom_call.1} parent=11 // pred_fallthru
          _
        // Predicated region
        $region33: #{tpu_custom_call.1} parent=11 // pred_check
          %p304 = pneg %p246
        $region34: #{tpu_custom_call.1} parent=11 // pred_check_branch
          %306 = sbr.rel (%p304) target = $region36
        $region35: #{tpu_custom_call.1} parent=11 // pred_region
          _
        $region36: #{tpu_custom_call.1} parent=11 // pred_fallthru
          _
      $region12: #{tpu_custom_call.1} parent=5 // pred_fallthru
        _
      %p307 = scmp.lt.s32.totalorder %s24, 2
      // Predicated region
      $region37: #{tpu_custom_call.1} parent=5 // pred_check
        %p308 = pneg %p307
      $region38: #{tpu_custom_call.1} parent=5 // pred_check_branch
        %310 = sbr.rel (%p308) target = $region40
      $region39: #{tpu_custom_call.1} parent=5 // pred_region
        // Predicated region
        $region41: #{tpu_custom_call.1} parent=39 // pred_check
          %p311 = pneg %p58
        $region42: #{tpu_custom_call.1} parent=39 // pred_check_branch
          %313 = sbr.rel (%p311) target = $region44
        $region43: #{tpu_custom_call.1} parent=39 // pred_region
          %s314 = smul.u32 2, %s32
          %p315 = scmp.lt.s32.totalorder %s31, 1
          %s316 = scalar_select %p315, %s31, 1
          %p317 = scmp.lt.s32.totalorder %s314, 1
          %s318 = scalar_select %p317, %s314, 1
          %s319 = smul.addr %s316, 2
          %s320 = sadd.s32 %s318, %s319
          %s321 = smul.addr %s320, 4
          %s322 = scalar_lea.vmem %s0, %s321
          %s323 = smul.u32 2, %s32
        $region44: #{tpu_custom_call.1} parent=39 // pred_fallthru
          _
        // Predicated region
        $region45: #{tpu_custom_call.1} parent=39 // pred_check
          %p324 = pneg %p86
        $region46: #{tpu_custom_call.1} parent=39 // pred_check_branch
          %326 = sbr.rel (%p324) target = $region48
        $region47: #{tpu_custom_call.1} parent=39 // pred_region
          %s327 = sand.u32 %s76, 1
          %s328 = scalar_lea.sflag [#allocation3], %s327
          %s329 = sand.u32 %s76, 1
          %s330 = smul.addr %s329, 4
          %s331 = scalar_lea.vmem [#allocation2], %s330
          %s333 = ssub.s32 64, 64
          %334 = vsyncadd %s328, %s333
          %s335 = sadd.s32 %s32, %s31
          %s336 = smul.addr %s335, 64
          %s337 = scalar_lea.hbm %s1, %s336
          %s339 = sshll.u32 %s331, 4
          %s340 = int_to_ptr.vmem [resolvable:$true] %s339
          %342 = dma.hbm_to_vmem [thread:$0]  %s337, 64, %s340, %s328
        $region48: #{tpu_custom_call.1} parent=39 // pred_fallthru
          _
        // Predicated region
        $region49: #{tpu_custom_call.1} parent=39 // pred_check
          %p343 = pneg %p114
        $region50: #{tpu_custom_call.1} parent=39 // pred_check_branch
          %345 = sbr.rel (%p343) target = $region52
        $region51: #{tpu_custom_call.1} parent=39 // pred_region
          %s346 = sand.u32 %s104, 1
          %s347 = scalar_lea.sflag [#allocation6], %s346
          %s348 = sand.u32 %s104, 1
          %s349 = smul.addr %s348, 4
          %s350 = scalar_lea.vmem [#allocation5], %s349
          %s352 = ssub.s32 64, 64
          %353 = vsyncadd %s347, %s352
          %s354 = sadd.s32 %s32, %s31
          %s355 = smul.addr %s354, 64
          %s356 = scalar_lea.hbm %s2, %s355
          %s358 = sshll.u32 %s350, 4
          %s359 = int_to_ptr.vmem [resolvable:$true] %s358
          %361 = dma.hbm_to_vmem [thread:$0]  %s356, 64, %s359, %s347
        $region52: #{tpu_custom_call.1} parent=39 // pred_fallthru
          _
      $region40: #{tpu_custom_call.1} parent=5 // pred_fallthru
        _
      %p362 = scmp.le.s32.totalorder 1, %s24
      %p363 = scmp.lt.s32.totalorder %s24, 3
      %p364 = pnand %p362, %p363
      %p365 = pneg %p364
      // Predicated region
      $region53: #{tpu_custom_call.1} parent=5 // pred_check
        _
      $region54: #{tpu_custom_call.1} parent=5 // pred_check_branch
        %367 = sbr.rel (%p364) target = $region56
      $region55: #{tpu_custom_call.1} parent=5 // pred_region
        %s368 = ssub.s32 %s24, 1
        %s369 = sand.u32 %s79, 1
        %s370 = scalar_lea.sflag [#allocation3], %s369
        %s371 = sand.u32 %s79, 1
        %s372 = smul.addr %s371, 4
        %s373 = scalar_lea.vmem [#allocation2], %s372
        // Predicated region
        $region57: #{tpu_custom_call.1} parent=55 // pred_check
          %p374 = pneg %p92
        $region58: #{tpu_custom_call.1} parent=55 // pred_check_branch
          %376 = sbr.rel (%p374) target = $region60
        $region59: #{tpu_custom_call.1} parent=55 // pred_region
          %377 = dma.done %s370, 64
        $region60: #{tpu_custom_call.1} parent=55 // pred_fallthru
          _
        %s378 = sand.u32 %s107, 1
        %s379 = scalar_lea.sflag [#allocation6], %s378
        %s380 = sand.u32 %s107, 1
        %s381 = smul.addr %s380, 4
        %s382 = scalar_lea.vmem [#allocation5], %s381
        // Predicated region
        $region61: #{tpu_custom_call.1} parent=55 // pred_check
          %p383 = pneg %p120
        $region62: #{tpu_custom_call.1} parent=55 // pred_check_branch
          %385 = sbr.rel (%p383) target = $region64
        $region63: #{tpu_custom_call.1} parent=55 // pred_region
          %386 = dma.done %s379, 64
        $region64: #{tpu_custom_call.1} parent=55 // pred_fallthru
          _
        %s387 = smul.u32 2, %s34
        %p388 = scmp.lt.s32.totalorder %s33, 1
        %s389 = scalar_select %p388, %s33, 1
        %p390 = scmp.lt.s32.totalorder %s387, 1
        %s391 = scalar_select %p390, %s387, 1
        %s392 = smul.addr %s389, 2
        %s393 = sadd.s32 %s391, %s392
        %s394 = smul.addr %s393, 4
        %s395 = scalar_lea.vmem %s0, %s394
        %p396 = pneg %p64
        %p397 = pneg %p61
        %s398 = sand.u32 %s79, 1
        %s399 = scalar_lea.sflag [#allocation3], %s398
        %s400 = sand.u32 %s79, 1
        %s401 = smul.addr %s400, 4
        %s402 = scalar_lea.vmem [#allocation2], %s401
        %p403 = pneg %p92
        %p404 = pneg %p89
        %s405 = sand.u32 %s107, 1
        %s406 = scalar_lea.sflag [#allocation6], %s405
        %s407 = sand.u32 %s107, 1
        %s408 = smul.addr %s407, 4
        %s409 = scalar_lea.vmem [#allocation5], %s408
        %p410 = pneg %p120
        %p411 = pneg %p117
        %p412 = pneg %p141
        %p413 = pneg %p138
        %p414 = pneg %p162
        %p415 = pneg %p159
        %p416 = pneg %p183
        %p417 = pneg %p180
        %p418 = pneg %p204
        %p419 = pneg %p201
        %p420 = pneg %p225
        %p421 = pneg %p222
        %p422 = pneg %p246
        %p423 = pneg %p243
        %p424 = pneg %p274
        %p425 = pneg %p271
        %s426 = sand.u32 %s261, 1
        %s427 = scalar_lea.sflag [#allocation4], %s426
        %s428 = sand.u32 %s261, 1
        %s429 = smul.addr %s428, 16
        %s430 = scalar_lea.vmem [#allocation7], %s429
        %s431 = smul.u32 2, %s34
        %p432 = scmp.lt.s32.totalorder %s33, 1
        %s433 = scalar_select %p432, %s33, 1
        %p434 = scmp.lt.s32.totalorder %s431, 1
        %s435 = scalar_select %p434, %s431, 1
        %s436 = smul.addr %s433, 2
        %s437 = sadd.s32 %s435, %s436
        %s438 = smul.addr %s437, 4
        %s439 = scalar_lea.vmem %s0, %s438
        %s440 = smul.u32 2, %s34
        %s441 = smul.u32 2, %s34
        %v442 = vld [vmem:[%s373] sm:$0xf]
        %v443 = vld [vmem:[%s439] sm:$0xff]
        %v444 = vld [vmem:[%s382] sm:$0xf]
        %v446 = vcombine.high %v443, %v443
        %447 = vrot.lane.b32.xlu0 %v443, 16
        %v448 = vpop.permute.xlu0 %447
        %449 = vrot.lane.b32.xlu0 %v446, 16
        %v450 = vpop.permute.xlu0 %449
        %vm451 = vcmask 130048
        %v452 = vsel %vm451, %v448, %v450
        %457 = vrot.lane.b32.xlu0 %v444, 16
        %v458 = vpop.permute.xlu0 %457
        %v460 = vsel %vm451, %v442, %v448
        %v461 = vsel %vm451, %v450, %v458
        %v462 = vld [vmem:[%s3] sm:$0xf]
        %464 = vset.pattern.permute.xlu0 0
        %465 = vperm.xlu0 %464, %v462
        %v466 = vpop.permute.xlu0 %465
        %v468 = vlaneseq
        %v469 = vshrl.u32 %v468, 7
        %v470 = vsub.s32 0, %v469
        %v471 = vrot.slane %v460, %v470
        %v472 = vlaneseq
        %v473 = vshrl.u32 %v472, 7
        %v474 = vsub.s32 0, %v473
        %v475 = vrot.slane %v452, %v474
        %v476 = vlaneseq
        %v477 = vshrl.u32 %v476, 7
        %v478 = vsub.s32 0, %v477
        %v479 = vrot.slane %v461, %v478
        %v480 = vmul.f32 %v466, %v471
        %v481 = vmul.f32 %v466, %v475
        %v482 = vmul.f32 %v466, %v479
        %483 = vset.pattern.permute.xlu0 1
        %484 = vperm.xlu0 %483, %v462
        %v485 = vpop.permute.xlu0 %484
        %v487 = vlaneseq
        %v488 = vshrl.u32 %v487, 7
        %v489 = vsub.s32 1, %v488
        %v490 = vrot.slane %v460, %v489
        %v491 = vlaneseq
        %v492 = vshrl.u32 %v491, 7
        %v493 = vsub.s32 1, %v492
        %v494 = vrot.slane %v452, %v493
        %v495 = vlaneseq
        %v496 = vshrl.u32 %v495, 7
        %v497 = vsub.s32 1, %v496
        %v498 = vrot.slane %v461, %v497
        %v499 = vmul.f32 %v485, %v490
        %v500 = vmul.f32 %v485, %v494
        %v501 = vmul.f32 %v485, %v498
        %502 = vset.pattern.permute.xlu0 2
        %503 = vperm.xlu0 %502, %v462
        %v504 = vpop.permute.xlu0 %503
        %v506 = vlaneseq
        %v507 = vshrl.u32 %v506, 7
        %v508 = vsub.s32 2, %v507
        %v509 = vrot.slane %v460, %v508
        %v510 = vlaneseq
        %v511 = vshrl.u32 %v510, 7
        %v512 = vsub.s32 2, %v511
        %v513 = vrot.slane %v452, %v512
        %v514 = vlaneseq
        %v515 = vshrl.u32 %v514, 7
        %v516 = vsub.s32 2, %v515
        %v517 = vrot.slane %v461, %v516
        %v518 = vmul.f32 %v504, %v509
        %v519 = vmul.f32 %v504, %v513
        %v520 = vmul.f32 %v504, %v517
        %521 = vset.pattern.permute.xlu0 3
        %522 = vperm.xlu0 %521, %v462
        %v523 = vpop.permute.xlu0 %522
        %v525 = vlaneseq
        %v526 = vshrl.u32 %v525, 7
        %v527 = vsub.s32 3, %v526
        %v528 = vrot.slane %v460, %v527
        %v529 = vlaneseq
        %v530 = vshrl.u32 %v529, 7
        %v531 = vsub.s32 3, %v530
        %v532 = vrot.slane %v452, %v531
        %v533 = vlaneseq
        %v534 = vshrl.u32 %v533, 7
        %v535 = vsub.s32 3, %v534
        %v536 = vrot.slane %v461, %v535
        %v537 = vmul.f32 %v523, %v528
        %v538 = vmul.f32 %v523, %v532
        %v539 = vmul.f32 %v523, %v536
        %v540 = vadd.f32 %v480, %v499
        %v541 = vadd.f32 %v481, %v500
        %v542 = vadd.f32 %v482, %v501
        %v543 = vadd.f32 %v540, %v518
        %v544 = vadd.f32 %v541, %v519
        %v545 = vadd.f32 %v542, %v520
        %v546 = vadd.f32 %v543, %v537
        %v547 = vadd.f32 %v544, %v538
        %v548 = vadd.f32 %v545, %v539
        %v549 = vmax.f32 %v546, 0.0
        %v550 = vmax.f32 %v547, 0.0
        %v551 = vmax.f32 %v548, 0.0
        %v552 = vld [vmem:[%s4] sm:$0xf]
        %554 = vset.pattern.permute.xlu0 0
        %555 = vperm.xlu0 %554, %v552
        %v556 = vpop.permute.xlu0 %555
        %v558 = vmul.f32 %v549, %v556
        %v559 = vmul.f32 %v550, %v556
        %v560 = vmul.f32 %v551, %v556
        %v561 = vld [vmem:[%s5] sm:$0xf]
        %563 = vset.pattern.permute.xlu0 0
        %564 = vperm.xlu0 %563, %v561
        %v565 = vpop.permute.xlu0 %564
        %v567 = vadd.f32 %v558, %v565
        %v568 = vadd.f32 %v559, %v565
        %v569 = vadd.f32 %v560, %v565
        %v570 = vlaneseq
        %v571 = vand.u32 %v570, 127
        %v572 = vadd.s32 %v571, 128
        %v573 = vadd.s32 %v571, 256
        %p574 = scmp.gt.s32.totalorder %s34, 0
        %s575 = scalar_select %p574, 1.0, 0.0
        %p576 = scmp.lt.s32.totalorder %s34, 0
        %s577 = scalar_select %p576, 1.0, 0.0
        %vm578 = vcmp.lt.s32.totalorder %v571, 16
        %vm579 = vcmp.lt.s32.totalorder %v572, 16
        %vm580 = vcmp.lt.s32.totalorder %v573, 16
        %vm581 = vcmp.ge.s32.totalorder %v571, 272
        %vm582 = vcmp.ge.s32.totalorder %v572, 272
        %vm583 = vcmp.ge.s32.totalorder %v573, 272
        %v584 = vstv %s577
        %v585 = vsel %vm581, %v584, 1.0
        %v586 = vsel %vm582, %v584, 1.0
        %v587 = vsel %vm583, %v584, 1.0
        %v588 = vstv %s575
        %v589 = vsel %vm578, %v588, %v585
        %v590 = vsel %vm579, %v588, %v586
        %v591 = vsel %vm580, %v588, %v587
        %v592 = vmul.f32 %v567, %v589
        %v593 = vmul.f32 %v568, %v590
        %v594 = vmul.f32 %v569, %v591
        %598 = vrot.lane.b32.xlu0 %v592, 1
        %v599 = vpop.permute.xlu0 %598
        %600 = vrot.lane.b32.xlu0 %v593, 1
        %v601 = vpop.permute.xlu0 %600
        %602 = vrot.lane.b32.xlu0 %v594, 1
        %v603 = vpop.permute.xlu0 %602
        %vm604 = vcmask 7168
        %v605 = vsel %vm604, %v599, %v601
        %v606 = vsel %vm604, %v601, %v603
        %v610 = vsel %vm604, 0.0, %v599
        %vm611 = vcmask 269312
        %v612 = vsel %vm611, %v606, 0.0
        %v613 = vadd.s32 %v571, 15
        %v614 = vadd.s32 %v572, 15
        %v615 = vadd.s32 %v573, 15
        %vm616 = vcmp.lt.s32.totalorder %v613, 0
        %v617 = vsub.s32 0, %v613
        %v618 = vsel %vm616, %v617, %v613
        %v619 = vshrl.u32 %v618, 4
        %v620 = vand.u32 %v618, 15
        %v621 = vsub.s32 0, %v620
        %v622 = vsel %vm616, %v621, %v620
        %vm623 = vcmp.lt.s32.totalorder %v614, 0
        %v624 = vsub.s32 0, %v614
        %v625 = vsel %vm623, %v624, %v614
        %v626 = vshrl.u32 %v625, 4
        %v627 = vand.u32 %v625, 15
        %v628 = vsub.s32 0, %v627
        %v629 = vsel %vm623, %v628, %v627
        %vm630 = vcmp.lt.s32.totalorder %v615, 0
        %v631 = vsub.s32 0, %v615
        %v632 = vsel %vm630, %v631, %v615
        %v633 = vshrl.u32 %v632, 4
        %v634 = vand.u32 %v632, 15
        %v635 = vsub.s32 0, %v634
        %v636 = vsel %vm630, %v635, %v634
        %vm637 = vcmp.ne.s32.totalorder %v622, 0
        %vm638 = vcmp.ne.s32.totalorder %v629, 0
        %vm639 = vcmp.ne.s32.totalorder %v636, 0
        %vm640 = vcmp.lt.s32.totalorder %v622, 0
        %vm641 = vcmp.lt.s32.totalorder %v629, 0
        %vm642 = vcmp.lt.s32.totalorder %v636, 0
        %vm643 = vmand %vm640, %vm637
        %vm644 = vmand %vm641, %vm638
        %vm645 = vmand %vm642, %vm639
        %v646 = vadd.s32 %v622, 16
        %v647 = vadd.s32 %v629, 16
        %v648 = vadd.s32 %v636, 16
        %v649 = vsel %vm643, %v646, %v622
        %v650 = vsel %vm644, %v647, %v629
        %v651 = vsel %vm645, %v648, %v636
        %vm652 = vcmp.eq.s32.totalorder %v649, 15
        %vm653 = vcmp.eq.s32.totalorder %v650, 15
        %vm654 = vcmp.eq.s32.totalorder %v651, 15
        %v655 = vsel %vm652, 1, 0
        %v656 = vsel %vm653, 1, 0
        %v657 = vsel %vm654, 1, 0
        %vm658 = vcmp.eq.s32.totalorder %v655, 1
        %vm659 = vcmp.eq.s32.totalorder %v656, 1
        %vm660 = vcmp.eq.s32.totalorder %v657, 1
        %v661 = vsel %vm658, 0.0, %v610
        %v662 = vsel %vm659, 0.0, %v605
        %v663 = vsel %vm660, 0.0, %v612
        %vm664 = vcmp.eq.s32.totalorder %v649, 0
        %vm665 = vcmp.eq.s32.totalorder %v650, 0
        %vm666 = vcmp.eq.s32.totalorder %v651, 0
        %v667 = vsel %vm664, 1, 0
        %v668 = vsel %vm665, 1, 0
        %v669 = vsel %vm666, 1, 0
        %vm670 = vcmp.eq.s32.totalorder %v667, 1
        %vm671 = vcmp.eq.s32.totalorder %v668, 1
        %vm672 = vcmp.eq.s32.totalorder %v669, 1
        %v673 = vsel %vm670, 0.0, %v610
        %v674 = vsel %vm671, 0.0, %v605
        %v675 = vsel %vm672, 0.0, %v612
        %v676 = vld [vmem:[%s6] sm:$0xf]
        %678 = vset.pattern.permute.xlu0 0
        %679 = vperm.xlu0 %678, %v676
        %v680 = vpop.permute.xlu0 %679
        %v682 = vmul.f32 %v680, %v661
        %v683 = vmul.f32 %v680, %v662
        %684 = vset.pattern.permute.xlu0 1
        %685 = vperm.xlu0 %684, %v676
        %v686 = vpop.permute.xlu0 %685
        %v688 = vmul.f32 %v686, %v610
        %v689 = vmul.f32 %v686, %v605
        %v690 = vmul.f32 %v686, %v612
        %691 = vset.pattern.permute.xlu0 2
        %692 = vperm.xlu0 %691, %v676
        %v693 = vpop.permute.xlu0 %692
        %v695 = vmul.f32 %v693, %v673
        %v696 = vmul.f32 %v693, %v674
        %v697 = vmul.f32 %v693, %v675
        %698 = vset.pattern.permute.xlu0 3
        %699 = vperm.xlu0 %698, %v676
        %v700 = vpop.permute.xlu0 %699
        %v702 = vmul.f32 %v700, %v661
        %v703 = vmul.f32 %v700, %v662
        %v704 = vmul.f32 %v700, %v663
        %708 = vrot.lane.b32.xlu0 %v702, 112
        %v709 = vpop.permute.xlu0 %708
        %710 = vrot.lane.b32.xlu0 %v703, 112
        %v711 = vpop.permute.xlu0 %710
        %712 = vrot.lane.b32.xlu0 %v704, 112
        %v713 = vpop.permute.xlu0 %712
        %vm714 = vcmask 916480
        %v715 = vsel %vm714, %v709, %v711
        %v716 = vsel %vm714, %v711, %v713
        %v719 = vadd.f32 %v682, %v715
        %v720 = vadd.f32 %v683, %v716
        %721 = vset.pattern.permute.xlu0 4
        %722 = vperm.xlu0 %721, %v676
        %v723 = vpop.permute.xlu0 %722
        %v725 = vmul.f32 %v723, %v610
        %v726 = vmul.f32 %v723, %v605
        %v727 = vmul.f32 %v723, %v612
        %731 = vrot.lane.b32.xlu0 %v725, 112
        %v732 = vpop.permute.xlu0 %731
        %733 = vrot.lane.b32.xlu0 %v726, 112
        %v734 = vpop.permute.xlu0 %733
        %735 = vrot.lane.b32.xlu0 %v727, 112
        %v736 = vpop.permute.xlu0 %735
        %v737 = vsel %vm714, %v732, %v734
        %v738 = vsel %vm714, %v734, %v736
        %v742 = vadd.f32 %v688, %v737
        %v743 = vadd.f32 %v689, %v738
        %v744 = vadd.f32 %v690, %v736
        %745 = vset.pattern.permute.xlu0 5
        %746 = vperm.xlu0 %745, %v676
        %v747 = vpop.permute.xlu0 %746
        %v749 = vmul.f32 %v747, %v673
        %v750 = vmul.f32 %v747, %v674
        %v751 = vmul.f32 %v747, %v675
        %755 = vrot.lane.b32.xlu0 %v749, 112
        %v756 = vpop.permute.xlu0 %755
        %757 = vrot.lane.b32.xlu0 %v750, 112
        %v758 = vpop.permute.xlu0 %757
        %759 = vrot.lane.b32.xlu0 %v751, 112
        %v760 = vpop.permute.xlu0 %759
        %v761 = vsel %vm714, %v756, %v758
        %v762 = vsel %vm714, %v758, %v760
        %v766 = vadd.f32 %v695, %v761
        %v767 = vadd.f32 %v696, %v762
        %v768 = vadd.f32 %v697, %v760
        %769 = vset.pattern.permute.xlu0 6
        %770 = vperm.xlu0 %769, %v676
        %v771 = vpop.permute.xlu0 %770
        %v773 = vmul.f32 %v771, %v661
        %v774 = vmul.f32 %v771, %v662
        %v775 = vmul.f32 %v771, %v663
        %779 = vrot.lane.b32.xlu0 %v773, 96
        %v780 = vpop.permute.xlu0 %779
        %781 = vrot.lane.b32.xlu0 %v774, 96
        %v782 = vpop.permute.xlu0 %781
        %783 = vrot.lane.b32.xlu0 %v775, 96
        %v784 = vpop.permute.xlu0 %783
        %vm785 = vcmask 785408
        %v786 = vsel %vm785, %v780, %v782
        %v787 = vsel %vm785, %v782, %v784
        %v790 = vadd.f32 %v719, %v786
        %v791 = vadd.f32 %v720, %v787
        %792 = vset.pattern.permute.xlu0 7
        %793 = vperm.xlu0 %792, %v676
        %v794 = vpop.permute.xlu0 %793
        %v796 = vmul.f32 %v794, %v610
        %v797 = vmul.f32 %v794, %v605
        %v798 = vmul.f32 %v794, %v612
        %802 = vrot.lane.b32.xlu0 %v796, 96
        %v803 = vpop.permute.xlu0 %802
        %804 = vrot.lane.b32.xlu0 %v797, 96
        %v805 = vpop.permute.xlu0 %804
        %806 = vrot.lane.b32.xlu0 %v798, 96
        %v807 = vpop.permute.xlu0 %806
        %v808 = vsel %vm785, %v803, %v805
        %v809 = vsel %vm785, %v805, %v807
        %v813 = vadd.f32 %v742, %v808
        %v814 = vadd.f32 %v743, %v809
        %v815 = vadd.f32 %v744, %v807
        %816 = vset.pattern.permute.xlu0 8
        %817 = vperm.xlu0 %816, %v676
        %v818 = vpop.permute.xlu0 %817
        %v820 = vmul.f32 %v818, %v673
        %v821 = vmul.f32 %v818, %v674
        %v822 = vmul.f32 %v818, %v675
        %826 = vrot.lane.b32.xlu0 %v820, 96
        %v827 = vpop.permute.xlu0 %826
        %828 = vrot.lane.b32.xlu0 %v821, 96
        %v829 = vpop.permute.xlu0 %828
        %830 = vrot.lane.b32.xlu0 %v822, 96
        %v831 = vpop.permute.xlu0 %830
        %v832 = vsel %vm785, %v827, %v829
        %v833 = vsel %vm785, %v829, %v831
        %v837 = vadd.f32 %v766, %v832
        %v838 = vadd.f32 %v767, %v833
        %v839 = vadd.f32 %v768, %v831
        %843 = vrot.lane.b32.xlu0 %v813, 127
        %v844 = vpop.permute.xlu0 %843
        %845 = vrot.lane.b32.xlu0 %v814, 127
        %v846 = vpop.permute.xlu0 %845
        %847 = vrot.lane.b32.xlu0 %v815, 127
        %v848 = vpop.permute.xlu0 %847
        %vm849 = vcmask 1039360
        %v850 = vsel %vm849, %v844, %v846
        %v851 = vsel %vm849, %v846, %v848
        %v854 = vadd.f32 %v790, %v850
        %v855 = vadd.f32 %v791, %v851
        %859 = vrot.lane.b32.xlu0 %v837, 126
        %v860 = vpop.permute.xlu0 %859
        %861 = vrot.lane.b32.xlu0 %v838, 126
        %v862 = vpop.permute.xlu0 %861
        %863 = vrot.lane.b32.xlu0 %v839, 126
        %v864 = vpop.permute.xlu0 %863
        %vm865 = vcmask 1031168
        %v866 = vsel %vm865, %v860, %v862
        %v867 = vsel %vm865, %v862, %v864
        %v870 = vadd.f32 %v854, %v866
        %v871 = vadd.f32 %v855, %v867
        %v872 = vmax.f32 %v870, 0.0
        %v873 = vmax.f32 %v871, 0.0
        %v874 = vld [vmem:[%s7] sm:$0xf]
        %876 = vset.pattern.permute.xlu0 0
        %877 = vperm.xlu0 %876, %v874
        %v878 = vpop.permute.xlu0 %877
        %v880 = vmul.f32 %v872, %v878
        %v881 = vmul.f32 %v873, %v878
        %v882 = vld [vmem:[%s8] sm:$0xf]
        %884 = vset.pattern.permute.xlu0 0
        %885 = vperm.xlu0 %884, %v882
        %v886 = vpop.permute.xlu0 %885
        %v888 = vadd.f32 %v880, %v886
        %v889 = vadd.f32 %v881, %v886
        %v892 = vrot.slane %v888, 4
        %v893 = vrot.slane %v889, 4
        %894 = vrot.lane.b32.xlu0 %v892, 16
        %v895 = vpop.permute.xlu0 %894
        %896 = vrot.lane.b32.xlu0 %v893, 16
        %v897 = vpop.permute.xlu0 %896
        %v898 = vsel %vm451, %v895, %v897
        %vm902 = vcmask 1043456
        %v903 = vsel %vm902, %v592, %v895
        %v904 = vsel %vm902, %v593, %v898
        %v905 = vsel %vm902, %v594, %v897
        %909 = vrot.lane.b32.xlu0 %v903, 112
        %v910 = vpop.permute.xlu0 %909
        %911 = vrot.lane.b32.xlu0 %v904, 112
        %v912 = vpop.permute.xlu0 %911
        %913 = vrot.lane.b32.xlu0 %v905, 112
        %v914 = vpop.permute.xlu0 %913
        %v915 = vsel %vm714, %v910, %v912
        %v916 = vsel %vm714, %v912, %v914
        %919 = vst [vmem:[%s430] sm:$0xff] %v915
        %920 = vst [vmem:[%s430 + $0x8] sm:$0xff] %v916
        %s921 = sand.u32 %s261, 1
        %s922 = scalar_lea.sflag [#allocation4], %s921
        %s923 = sand.u32 %s261, 1
        %s924 = smul.addr %s923, 16
        %s925 = scalar_lea.vmem [#allocation7], %s924
        // Predicated region
        $region65: #{tpu_custom_call.1} parent=55 // pred_check
          %p926 = pneg %p271
        $region66: #{tpu_custom_call.1} parent=55 // pred_check_branch
          %928 = sbr.rel (%p926) target = $region68
        $region67: #{tpu_custom_call.1} parent=55 // pred_region
          %s929 = smul.u32 2, %s34
          %s931 = ssub.s32 256, 256
          %932 = vsyncadd %s922, %s931
          %s933 = smul.addr %s33, 2
          %s934 = sadd.s32 %s929, %s933
          %s935 = smul.addr %s934, 128
          %s936 = scalar_lea.hbm %s9, %s935
          %s938 = sshll.u32 %s925, 4
          %s939 = int_to_ptr.vmem [resolvable:$true] %s938
          %941 = dma.vmem_to_hbm [thread:$0]  %s939, 256, %s936, %s922
        $region68: #{tpu_custom_call.1} parent=55 // pred_fallthru
          _
      $region56: #{tpu_custom_call.1} parent=5 // pred_fallthru
        _
      %p942 = scmp.le.s32.totalorder 2, %s24
      // Predicated region
      $region69: #{tpu_custom_call.1} parent=5 // pred_check
        %p943 = pneg %p942
      $region70: #{tpu_custom_call.1} parent=5 // pred_check_branch
        %945 = sbr.rel (%p943) target = $region72
      $region71: #{tpu_custom_call.1} parent=5 // pred_region
        %s946 = ssub.s32 %s24, 2
        // Predicated region
        $region73: #{tpu_custom_call.1} parent=71 // pred_check
          %p947 = pneg %p277
        $region74: #{tpu_custom_call.1} parent=71 // pred_check_branch
          %949 = sbr.rel (%p947) target = $region76
        $region75: #{tpu_custom_call.1} parent=71 // pred_region
          %s950 = sand.u32 %s262, 1
          %s951 = scalar_lea.sflag [#allocation4], %s950
          %s952 = sand.u32 %s262, 1
          %s953 = smul.addr %s952, 16
          %s954 = scalar_lea.vmem [#allocation7], %s953
          %955 = dma.done %s951, 256
        $region76: #{tpu_custom_call.1} parent=71 // pred_fallthru
          _
      $region72: #{tpu_custom_call.1} parent=5 // pred_fallthru
        _
    $region6: #{tpu_custom_call.1} parent=1 // loop_footer
      %s28 = sadd.s32 1, %s24
    $region7: #{tpu_custom_call.1} parent=1 // loop_footer_branch
      %23 = sbr.rel target = $region3
    $region8: #{tpu_custom_call.1} parent=1 // loop_exit
      _
    %956 = vsyncpa [#allocation3], 1
    %s957 = scalar_lea.sflag [#allocation3], 1
    %958 = vsyncpa %s957, 1
    %959 = vsyncpa [#allocation6], 1
    %s960 = scalar_lea.sflag [#allocation6], 1
    %961 = vsyncpa %s960, 1
    %962 = vsyncpa [#allocation4], 1
    %s963 = scalar_lea.sflag [#allocation4], 1
    %964 = vsyncpa %s963, 1

</llo_original>
